<compile_context>
chip_gen: v5e
topology: v5e:2x2
jax: 0.10.0
libtpu: 0.0.40
codegen_flags: <defaults>
</compile_context>

<pallas_src>
import math

import jax
import jax.numpy as jnp
from jax.experimental import pallas as pl
from jax.experimental.pallas import tpu as pltpu


def _round_up(x: int, m: int) -> int:
    return (x + m - 1) // m * m


def _cdiv(a: int, b: int) -> int:
    return -(-a // b)


def _chip_kind() -> str:
    try:
        kind = jax.devices()[0].device_kind.lower()
    except Exception:
        return "unknown"
    if "v7" in kind:
        return "v7x"
    if "v6" in kind:
        return "v6e"
    if "v5" in kind:
        return "v5e"
    return "unknown"


def _temp_scale_kernel(temp_ref, x_ref, o_ref):
    # temp_ref: (1,) f32 in SMEM.  One scalar reciprocal per grid step, then a
    # single vector multiply over the tile; compute in f32, downcast on store.
    inv = 1.0 / temp_ref[0]
    o_ref[...] = (x_ref[...] * inv).astype(o_ref.dtype)


def temperature_scale(logits: jax.Array,
                      temperature: jax.Array,
                      *,
                      min_pallas_bytes: int = 64 * 1024) -> jax.Array:
    """out = logits / temperature  (temperature: shape-(1,) learnable scalar)."""
    orig_shape = logits.shape
    dtype = logits.dtype
    total = int(math.prod(orig_shape)) if orig_shape else 1
    itemsize = jnp.dtype(dtype).itemsize

    temp = jnp.asarray(temperature, dtype=jnp.float32).reshape(-1)[:1]

    # Tiny inputs: a fused XLA elementwise op beats Pallas launch + reshapes.
    if total * itemsize < min_pallas_bytes:
        return (logits / temp[0]).astype(dtype)

    chip = _chip_kind()
    if chip == "v7x":
        target_block_bytes = 4 * 1024 * 1024   # faster HBM -> amortize step cost
        vmem_limit = 32 * 1024 * 1024          # 64 MiB physical on v7x
    elif chip == "v6e":
        target_block_bytes = 6 * 1024 * 1024   # ample 128 MiB VMEM
        vmem_limit = 64 * 1024 * 1024
    else:  # v5e / unknown: conservative
        target_block_bytes = 2 * 1024 * 1024
        vmem_limit = 32 * 1024 * 1024

    # Sublane minimum per dtype so packed rows stay aligned.
    min_rows = {4: 8, 2: 16, 1: 32}.get(itemsize, 8)
    last_dim = orig_shape[-1] if orig_shape else 1

    # ---- pick lane-dense width W (multiple of 128), preferring pad == 0 ----
    W = None
    pad_path = False
    if last_dim % 128 == 0 and 0 < last_dim * itemsize * min_rows <= 8 * 1024 * 1024:
        W = last_dim                      # (prod(lead), last) is a free reshape
    elif total % 128 == 0:
        t = total // 128                  # largest W = 128*mult dividing total, W <= 4096
        for mult in range(32, 0, -1):
            if t % mult == 0:
                W = 128 * mult
                break
    if W is None:                         # genuinely ragged total -> pad fallback
        pad_path = True
        W = 1024
        if total < W:
            W = max(128, _round_up(total, 128))

    rows = _cdiv(total, W)

    if pad_path:
        padded_total = rows * W           # pad only up to a multiple of W (< W extra elems)
        flat = logits.reshape(-1)
        pad = padded_total - total
        if pad:
            flat = jnp.pad(flat, (0, pad))
        x2d = flat.reshape(rows, W)
    else:
        x2d = logits.reshape(rows, W)     # zero-copy row-major reshape

    # ---- block_rows: ~target_block_bytes per buffer, sublane aligned ----
    if rows <= min_rows:
        block_rows = rows                 # full-extent block is always legal
    else:
        max_block_rows = max(
            min_rows,
            (target_block_bytes // (W * itemsize)) // min_rows * min_rows)
        block_rows = min(_round_up(rows, min_rows), max_block_rows)
        if chip == "v7x":
            # 2 TensorCores: prefer an even number of grid steps for balance.
            n = _cdiv(rows, block_rows)
            if n % 2 == 1:
                n_even = max(2, n + 1)
                block_rows = min(
                    block_rows,
                    max(min_rows, _round_up(_cdiv(rows, n_even), min_rows)))

    n_blocks = _cdiv(rows, block_rows)    # ragged final block handled by Pallas

    out2d = pl.pallas_call(
        _temp_scale_kernel,
        out_shape=jax.ShapeDtypeStruct((rows, W), dtype),
        grid=(n_blocks,),
        in_specs=[
            pl.BlockSpec(memory_space=pltpu.MemorySpace.SMEM),   # temperature
            pl.BlockSpec((block_rows, W), lambda i: (i, 0)),     # logits slab
        ],
        out_specs=pl.BlockSpec((block_rows, W), lambda i: (i, 0)),
        compiler_params=pltpu.CompilerParams(
            dimension_semantics=("parallel",),
            vmem_limit_bytes=vmem_limit,
        ),
    )(temp, x2d)

    if pad_path:
        return out2d.reshape(-1)[:total].reshape(orig_shape)
    return out2d.reshape(orig_shape)


if __name__ == "__main__":
    key = jax.random.PRNGKey(0)
    k1, k2, k3, k4 = jax.random.split(key, 4)

    # nn.Parameter(torch.ones(1)) init; non-trivial value so the check
    # actually exercises the scaling.
    temperature = jnp.array([1.7], dtype=jnp.float32)

    # Case 1: classic small logits [batch, classes] -> XLA fast path.
    x1 = jax.random.normal(k1, (8, 128), dtype=jnp.float32)
    o1 = jax.block_until_ready(temperature_scale(x1, temperature))
    assert o1.shape == x1.shape and o1.dtype == x1.dtype
    assert jnp.allclose(o1, x1 / temperature, atol=1e-5, rtol=1e-5)

    # Case 2: lane-aligned slab -> Pallas path with zero padding (free reshapes).
    x2 = jax.random.normal(k2, (32, 1024), dtype=jnp.float32)
    o2 = jax.block_until_ready(temperature_scale(x2, temperature))
    assert o2.shape == x2.shape
    assert jnp.allclose(o2, x2 / temperature, atol=1e-5, rtol=1e-5)

    # Case 3: ragged shape -> forced through the Pallas pad fallback path.
    x3 = jax.random.normal(k3, (3, 5, 37), dtype=jnp.float32)
    o3 = jax.block_until_ready(
        temperature_scale(x3, temperature, min_pallas_bytes=0))
    assert o3.shape == x3.shape
    assert jnp.allclose(o3, x3 / temperature, atol=1e-5, rtol=1e-5)

    # Case 4: bf16 logits exercise the f32-compute / downcast-on-store path.
    x4 = jax.random.normal(k4, (16, 256), dtype=jnp.bfloat16)
    o4 = jax.block_until_ready(
        temperature_scale(x4, temperature, min_pallas_bytes=0))
    assert o4.shape == x4.shape and o4.dtype == jnp.bfloat16
    ref4 = (x4.astype(jnp.float32) / 1.7).astype(jnp.bfloat16)
    assert jnp.allclose(o4.astype(jnp.float32), ref4.astype(jnp.float32),
                        atol=2e-2, rtol=2e-2)

    # TODO(synk): `calibrate` (LBFGS fitting of temperature against a
    # cross-entropy loss) is training-time logic, not part of the forward
    # pass, so it is intentionally not ported.

    print("KERNEL_OK")
</pallas_src>

<mosaic_0001>
module attributes {stable_mosaic.version = 11 : i64} {
  func.func @_temp_scale_kernel(%arg0: i32, %arg1: memref<1xf32, #tpu.memory_space<smem>>, %arg2: memref<32x1024xf32, #tpu.memory_space<vmem>>, %arg3: memref<32x1024xf32, #tpu.memory_space<vmem>>) attributes {dimension_semantics = [#tpu.dimension_semantics<parallel>], iteration_bounds = array<i64: 1>, scalar_prefetch = 0 : i64, scratch_operands = 0 : i64, tpu.core_type = #tpu.core_type<tc>, window_params = [{transform_indices = @transform_0, window_bounds = array<i64: 1>}, {transform_indices = @transform_1, window_bounds = array<i64: 32, 1024>}, {transform_indices = @transform_2, window_bounds = array<i64: 32, 1024>}]} {
    %c0 = arith.constant 0 : index
    %0 = memref.load %arg1[%c0] : memref<1xf32, #tpu.memory_space<smem>>
    %cst = arith.constant 1.000000e+00 : f32
    %1 = arith.divf %cst, %0 : f32
    %c0_0 = arith.constant 0 : index
    %c0_1 = arith.constant 0 : index
    %2 = vector.load %arg2[%c0_0, %c0_1] : memref<32x1024xf32, #tpu.memory_space<vmem>>, vector<32x1024xf32>
    %3 = vector.broadcast %1 : f32 to vector<32x1024xf32>
    %4 = arith.mulf %2, %3 : vector<32x1024xf32>
    %c0_2 = arith.constant 0 : index
    %c0_3 = arith.constant 0 : index
    %5 = vector.load %arg3[%c0_2, %c0_3] : memref<32x1024xf32, #tpu.memory_space<vmem>>, vector<32x1024xf32>
    tpu.vector_store %arg3[%c0_2, %c0_3], %4 {strides = array<i32>} : memref<32x1024xf32, #tpu.memory_space<vmem>>, vector<32x1024xf32>,
    return
  }
  func.func @transform_0(%arg0: i32) -> i32 {
    %c0_i32 = arith.constant 0 : i32
    %c0_i32_0 = arith.constant 0 : i32
    return %c0_i32 : i32
  }
  func.func @transform_1(%arg0: i32) -> (i32, i32) {
    %c0_i32 = arith.constant 0 : i32
    %c0_i32_0 = arith.constant 0 : i32
    return %arg0, %c0_i32 : i32, i32
  }
  func.func @transform_2(%arg0: i32) -> (i32, i32) {
    %c0_i32 = arith.constant 0 : i32
    %c0_i32_0 = arith.constant 0 : i32
    return %arg0, %c0_i32 : i32, i32
  }
}

</mosaic_0001>

<llo_original>
// kernel: tpu_custom_call.1
$region0: #{tpu_custom_call.1}
  #allocation0 [shape = 'u32[]', space=smem, size = 0x4, offset = 0x4, fixed_abs, tag = 'smem constant byte address 0x4 - core index']
  #allocation1 [shape = 'u32[72,128]{1,0:T(1,128)}', space=vmem, size = 0x9000, scoped, tag = 'internal scratch']
  #allocation2 [shape = 'f32[1]{0:T(128)S(6)}', space=smem, size = 0x200, scoped, tag = 'scoped memory for tpu_custom_call.1']
  %s0 = inlined_call_operand.<no memory space> [shape: f32[1], index: 0, kind: input, shape index: {}]
  %s1 = inlined_call_operand.hbm [shape: f32[32,1024], index: 1, kind: input, shape index: {}]
  %s2 = inlined_call_operand.hbm [shape: f32[32,1024], index: 2, kind: output, shape index: {}]
  %s3 = sld [smem:[#allocation0]]
  $region22: #{tpu_custom_call.1} parent=0
    _
  %s5 = ssub.s32 1, %s3
  %s6 = scalar_select 0, %s5, %s3
  %7 = sst [smem:[#allocation2]] %s0
  $region1: #{tpu_custom_call.1} parent=0
    #allocation3 [shape = 'u8[131072]{0}', space=vmem, size = 0x20000, scoped, tag = 'input window, operand 1, single buffered']
    #allocation4 [shape = 's32[1]{0}', space=sflag, size = 0x4, scoped, tag = 'scoped memory for tpu_custom_call.1']
    #allocation5 [shape = 's32[1]{0}', space=sflag, size = 0x4, scoped, tag = 'scoped memory for tpu_custom_call.1']
    #allocation6 [shape = 'u8[131072]{0}', space=vmem, size = 0x20000, scoped, tag = 'output window, operand 0, single buffered']
    %8 = vsyncpa [#allocation4], 0
    %9 = vsyncpa [#allocation5], 0
    // Predicated region
    $region2: #{tpu_custom_call.1} parent=1 // pred_check
      _
    $region3: #{tpu_custom_call.1} parent=1 // pred_check_branch
      %11 = sbr.rel (0) target = $region5
    $region4: #{tpu_custom_call.1} parent=1 // pred_region
      _
    $region5: #{tpu_custom_call.1} parent=1 // pred_fallthru
      _
    // Predicated region
    $region6: #{tpu_custom_call.1} parent=1 // pred_check
      _
    $region7: #{tpu_custom_call.1} parent=1 // pred_check_branch
      %13 = sbr.rel (0) target = $region9
    $region8: #{tpu_custom_call.1} parent=1 // pred_region
      %15 = vsyncadd [#allocation4], 0
      %s16 = sshll.u32 %s1, 4
      %s17 = int_to_ptr.hbm [resolvable:$true] %s16
      %s18 = sshll.u32 [#allocation3], 4
      %s19 = int_to_ptr.vmem [resolvable:$true] %s18
      %24 = dma.hbm_to_vmem [thread:$0]  %s17, 4096, %s19, [#allocation4], 1024, 1024, 64
    $region9: #{tpu_custom_call.1} parent=1 // pred_fallthru
      _
    // Predicated region
    $region10: #{tpu_custom_call.1} parent=1 // pred_check
      _
    $region11: #{tpu_custom_call.1} parent=1 // pred_check_branch
      %26 = sbr.rel (0) target = $region13
    $region12: #{tpu_custom_call.1} parent=1 // pred_region
      %28 = dma.done [#allocation4], 4096
    $region13: #{tpu_custom_call.1} parent=1 // pred_fallthru
      _
    %s29 = sld [smem:[#allocation2]]
    %v30 = vstv %s29
    %v31 = vrcp.pop %v30
    %v32 = vmul.f32 %v30, %v31
    %v33 = vsub.f32 1.0, %v32
    %v34 = vmul.f32 %v31, %v33
    %v35 = vadd.f32 %v31, %v34
    %vm36 = vweird.f32 %v30
    %vm37 = vweird.f32 %v31
    %vm38 = vmor %vm36, %vm37
    %v39 = vsel %vm38, %v31, %v35
    %v40 = vand.u32 2147483647, %v30
    %vm41 = vcmp.eq.f32.partialorder %v40, 8.507059e+37
    %v42 = vand.u32 %v30, 2147483648
    %v43 = vor.u32 1.1754944e-38, %v42
    %v44 = vsel %vm41, %v43, %v39
    %s45 = vtos %v44
    %v46 = vld [vmem:[#allocation3] sm:$0xff]
    %v47 = vld [vmem:[#allocation3 + $0x8] sm:$0xff]
    %v48 = vld [vmem:[#allocation3 + $0x10] sm:$0xff]
    %v49 = vld [vmem:[#allocation3 + $0x18] sm:$0xff]
    %v50 = vld [vmem:[#allocation3 + $0x20] sm:$0xff]
    %v51 = vld [vmem:[#allocation3 + $0x28] sm:$0xff]
    %v52 = vld [vmem:[#allocation3 + $0x30] sm:$0xff]
    %v53 = vld [vmem:[#allocation3 + $0x38] sm:$0xff]
    %v54 = vld [vmem:[#allocation3 + $0x40] sm:$0xff]
    %v55 = vld [vmem:[#allocation3 + $0x48] sm:$0xff]
    %v56 = vld [vmem:[#allocation3 + $0x50] sm:$0xff]
    %v57 = vld [vmem:[#allocation3 + $0x58] sm:$0xff]
    %v58 = vld [vmem:[#allocation3 + $0x60] sm:$0xff]
    %v59 = vld [vmem:[#allocation3 + $0x68] sm:$0xff]
    %v60 = vld [vmem:[#allocation3 + $0x70] sm:$0xff]
    %v61 = vld [vmem:[#allocation3 + $0x78] sm:$0xff]
    %v62 = vld [vmem:[#allocation3 + $0x80] sm:$0xff]
    %v63 = vld [vmem:[#allocation3 + $0x88] sm:$0xff]
    %v64 = vld [vmem:[#allocation3 + $0x90] sm:$0xff]
    %v65 = vld [vmem:[#allocation3 + $0x98] sm:$0xff]
    %v66 = vld [vmem:[#allocation3 + $0xa0] sm:$0xff]
    %v67 = vld [vmem:[#allocation3 + $0xa8] sm:$0xff]
    %v68 = vld [vmem:[#allocation3 + $0xb0] sm:$0xff]
    %v69 = vld [vmem:[#allocation3 + $0xb8] sm:$0xff]
    %v70 = vld [vmem:[#allocation3 + $0xc0] sm:$0xff]
    %v71 = vld [vmem:[#allocation3 + $0xc8] sm:$0xff]
    %v72 = vld [vmem:[#allocation3 + $0xd0] sm:$0xff]
    %v73 = vld [vmem:[#allocation3 + $0xd8] sm:$0xff]
    %v74 = vld [vmem:[#allocation3 + $0xe0] sm:$0xff]
    %v75 = vld [vmem:[#allocation3 + $0xe8] sm:$0xff]
    %v76 = vld [vmem:[#allocation3 + $0xf0] sm:$0xff]
    %v77 = vld [vmem:[#allocation3 + $0xf8] sm:$0xff]
    %v78 = vstv %s45
    %v79 = vmul.f32 %v46, %v78
    %v80 = vmul.f32 %v47, %v78
    %v81 = vmul.f32 %v48, %v78
    %v82 = vmul.f32 %v49, %v78
    %v83 = vmul.f32 %v50, %v78
    %v84 = vmul.f32 %v51, %v78
    %v85 = vmul.f32 %v52, %v78
    %v86 = vmul.f32 %v53, %v78
    %v87 = vmul.f32 %v54, %v78
    %v88 = vmul.f32 %v55, %v78
    %v89 = vmul.f32 %v56, %v78
    %v90 = vmul.f32 %v57, %v78
    %v91 = vmul.f32 %v58, %v78
    %v92 = vmul.f32 %v59, %v78
    %v93 = vmul.f32 %v60, %v78
    %v94 = vmul.f32 %v61, %v78
    %v95 = vmul.f32 %v62, %v78
    %v96 = vmul.f32 %v63, %v78
    %v97 = vmul.f32 %v64, %v78
    %v98 = vmul.f32 %v65, %v78
    %v99 = vmul.f32 %v66, %v78
    %v100 = vmul.f32 %v67, %v78
    %v101 = vmul.f32 %v68, %v78
    %v102 = vmul.f32 %v69, %v78
    %v103 = vmul.f32 %v70, %v78
    %v104 = vmul.f32 %v71, %v78
    %v105 = vmul.f32 %v72, %v78
    %v106 = vmul.f32 %v73, %v78
    %v107 = vmul.f32 %v74, %v78
    %v108 = vmul.f32 %v75, %v78
    %v109 = vmul.f32 %v76, %v78
    %v110 = vmul.f32 %v77, %v78
    %111 = vst [vmem:[#allocation6] sm:$0xff] %v79
    %112 = vst [vmem:[#allocation6 + $0x8] sm:$0xff] %v80
    %113 = vst [vmem:[#allocation6 + $0x10] sm:$0xff] %v81
    %114 = vst [vmem:[#allocation6 + $0x18] sm:$0xff] %v82
    %115 = vst [vmem:[#allocation6 + $0x20] sm:$0xff] %v83
    %116 = vst [vmem:[#allocation6 + $0x28] sm:$0xff] %v84
    %117 = vst [vmem:[#allocation6 + $0x30] sm:$0xff] %v85
    %118 = vst [vmem:[#allocation6 + $0x38] sm:$0xff] %v86
    %119 = vst [vmem:[#allocation6 + $0x40] sm:$0xff] %v87
    %120 = vst [vmem:[#allocation6 + $0x48] sm:$0xff] %v88
    %121 = vst [vmem:[#allocation6 + $0x50] sm:$0xff] %v89
    %122 = vst [vmem:[#allocation6 + $0x58] sm:$0xff] %v90
    %123 = vst [vmem:[#allocation6 + $0x60] sm:$0xff] %v91
    %124 = vst [vmem:[#allocation6 + $0x68] sm:$0xff] %v92
    %125 = vst [vmem:[#allocation6 + $0x70] sm:$0xff] %v93
    %126 = vst [vmem:[#allocation6 + $0x78] sm:$0xff] %v94
    %127 = vst [vmem:[#allocation6 + $0x80] sm:$0xff] %v95
    %128 = vst [vmem:[#allocation6 + $0x88] sm:$0xff] %v96
    %129 = vst [vmem:[#allocation6 + $0x90] sm:$0xff] %v97
    %130 = vst [vmem:[#allocation6 + $0x98] sm:$0xff] %v98
    %131 = vst [vmem:[#allocation6 + $0xa0] sm:$0xff] %v99
    %132 = vst [vmem:[#allocation6 + $0xa8] sm:$0xff] %v100
    %133 = vst [vmem:[#allocation6 + $0xb0] sm:$0xff] %v101
    %134 = vst [vmem:[#allocation6 + $0xb8] sm:$0xff] %v102
    %135 = vst [vmem:[#allocation6 + $0xc0] sm:$0xff] %v103
    %136 = vst [vmem:[#allocation6 + $0xc8] sm:$0xff] %v104
    %137 = vst [vmem:[#allocation6 + $0xd0] sm:$0xff] %v105
    %138 = vst [vmem:[#allocation6 + $0xd8] sm:$0xff] %v106
    %139 = vst [vmem:[#allocation6 + $0xe0] sm:$0xff] %v107
    %140 = vst [vmem:[#allocation6 + $0xe8] sm:$0xff] %v108
    %141 = vst [vmem:[#allocation6 + $0xf0] sm:$0xff] %v109
    %142 = vst [vmem:[#allocation6 + $0xf8] sm:$0xff] %v110
    // Predicated region
    $region14: #{tpu_custom_call.1} parent=1 // pred_check
      _
    $region15: #{tpu_custom_call.1} parent=1 // pred_check_branch
      %144 = sbr.rel (0) target = $region17
    $region16: #{tpu_custom_call.1} parent=1 // pred_region
      %146 = vsyncadd [#allocation5], 0
      %s147 = sshll.u32 [#allocation6], 4
      %s148 = int_to_ptr.vmem [resolvable:$true] %s147
      %s149 = sshll.u32 %s2, 4
      %s150 = int_to_ptr.hbm [resolvable:$true] %s149
      %155 = dma.vmem_to_hbm [thread:$0]  %s148, 4096, %s150, [#allocation5], 1024, 1024, 64
    $region17: #{tpu_custom_call.1} parent=1 // pred_fallthru
      _
    // Predicated region
    $region18: #{tpu_custom_call.1} parent=1 // pred_check
      _
    $region19: #{tpu_custom_call.1} parent=1 // pred_check_branch
      %157 = sbr.rel (0) target = $region21
    $region20: #{tpu_custom_call.1} parent=1 // pred_region
      %159 = dma.done [#allocation5], 4096
    $region21: #{tpu_custom_call.1} parent=1 // pred_fallthru
      _
    %160 = vsyncpa [#allocation4], 1
    %161 = vsyncpa [#allocation5], 1

</llo_original>
